<compile_context>
chip_gen: v5e
topology: v5e:2x2
jax: 0.10.0
libtpu: 0.0.40
codegen_flags: <defaults>
</compile_context>

<pallas_src>
import math

import jax
import jax.numpy as jnp
from jax.experimental import pallas as pl
from jax.experimental.pallas import tpu as pltpu

_LANE = 128
_SUB = 8
_MAX_TILE_R = 4096               # rows per block (multiple of 8)
_VMEM_LIMIT_BYTES = 48 * 1024 * 1024
_NEG_PAD = -1.0e4                # sigmoid(-1e4) underflows to exactly 0.0


def _make_kernel(tile_rows, valid_rows_last, ragged):
    """Build the accumulation kernel for a given (static) tiling.

    out_ref layout (f32[6, 8, 128]); each entry is an (8,128) partial of:
      0: sum(sigmoid(x) * t)      3: sum(sigmoid(x) * t * fg)
      1: sum(sigmoid(x))          4: sum(sigmoid(x) * fg)
      2: sum(t)                   5: sum(t * fg)
    """

    def kernel(x_ref, t_ref, m_ref, out_ref):
        g = pl.program_id(1)

        @pl.when(g == 0)
        def _():
            out_ref[...] = jnp.zeros_like(out_ref)

        x = jax.nn.sigmoid(x_ref[...].astype(jnp.float32))
        t = t_ref[...].astype(jnp.float32)
        m = m_ref[...].astype(jnp.float32)

        if ragged:
            # Last block overhangs the array: its tail rows hold unspecified
            # data, so zero them (jnp.where is NaN/Inf safe) before reducing.
            last = pl.num_programs(1) - 1
            valid = jnp.where(g == last, valid_rows_last, tile_rows)
            row = jax.lax.broadcasted_iota(jnp.int32, (tile_rows, _LANE), 0)
            ok = row < valid
            x = jnp.where(ok, x, 0.0)
            t = jnp.where(ok, t, 0.0)
            m = jnp.where(ok, m, 0.0)

        inter = x * t

        def part(v):
            # (tile_rows, 128) -> (8, 128): sublane-group reduce, VPU only.
            return jnp.sum(v.reshape(-1, _SUB, _LANE), axis=0)

        out_ref[0] += part(inter)
        out_ref[1] += part(x)
        out_ref[2] += part(t)
        out_ref[3] += part(inter * m)
        out_ref[4] += part(x * m)
        out_ref[5] += part(t * m)

    return kernel


def masked_dice_loss(inp, target, roi_mask, epsilon=1.0,
                     max_tile_rows=_MAX_TILE_R):
    """JAX/Pallas equivalent of MaskedDiceLoss.forward -> (1-dice, 1-dice_roi)."""
    assert inp.shape == target.shape
    n_samples = inp.shape[0]
    per_sample = math.prod(inp.shape[1:])
    assert roi_mask.shape[0] == n_samples and roi_mask.shape[1] >= 2
    assert math.prod(roi_mask.shape[2:]) == per_sample

    group = _SUB * _LANE  # 1024 elements == one (8,128) tile-row group

    if per_sample % group == 0:
        # --- fast path: no wrapper copies, ROI channel 1 read straight from
        # --- the NCHW buffer through the BlockSpec index_map.
        rows = per_sample // _LANE
        batch = n_samples
        x_arr = inp.reshape(n_samples, rows, _LANE)
        t_arr = target.reshape(n_samples, rows, _LANE)
        m_arr = roi_mask.reshape(n_samples, roi_mask.shape[1], rows, _LANE)
        roi_is_4d = True
    else:
        # --- fallback: misaligned spatial size -> one preprocessing pass
        # --- (channel slice + pad up to a multiple of 8*128).
        x = inp.reshape(-1)
        t = target.reshape(-1)
        m = roi_mask[:, 1].reshape(-1)
        total = x.shape[0]
        pad = (-total) % group
        if pad:
            x = jnp.pad(x, (0, pad), constant_values=_NEG_PAD)
            t = jnp.pad(t, (0, pad))
            m = jnp.pad(m, (0, pad))
        rows = (total + pad) // _LANE
        batch = 1
        x_arr = x.reshape(1, rows, _LANE)
        t_arr = t.reshape(1, rows, _LANE)
        m_arr = m.reshape(1, rows, _LANE)
        roi_is_4d = False

    tile_rows = min(int(max_tile_rows), rows)
    tile_rows = max(_SUB, (tile_rows // _SUB) * _SUB)   # multiple of 8
    g_dim = pl.cdiv(rows, tile_rows)
    ragged = (rows % tile_rows) != 0
    valid_rows_last = rows - (g_dim - 1) * tile_rows

    data_spec = pl.BlockSpec((None, tile_rows, _LANE), lambda n, g: (n, g, 0))
    if roi_is_4d:
        # Channel axis squeezed; fixed block index 1 selects the fg channel.
        m_spec = pl.BlockSpec((None, None, tile_rows, _LANE),
                              lambda n, g: (n, 1, g, 0))
    else:
        m_spec = data_spec
    out_spec = pl.BlockSpec((None, 6, _SUB, _LANE), lambda n, g: (n, 0, 0, 0))

    partials = pl.pallas_call(
        _make_kernel(tile_rows, valid_rows_last, ragged),
        out_shape=jax.ShapeDtypeStruct((batch, 6, _SUB, _LANE), jnp.float32),
        grid_spec=pltpu.PrefetchScalarGridSpec(
            num_scalar_prefetch=0,
            grid=(batch, g_dim),
            in_specs=[data_spec, data_spec, m_spec],
            out_specs=out_spec,
        ),
        compiler_params=pltpu.CompilerParams(
            dimension_semantics=("parallel", "arbitrary"),
            vmem_limit_bytes=_VMEM_LIMIT_BYTES,
        ),
    )(x_arr, t_arr, m_arr)

    # Final cross-lane / cross-sample reduce + dice arithmetic: a few FLOPs.
    s = jnp.sum(partials, axis=(0, 2, 3))
    eps = jnp.float32(epsilon)
    dice = (2.0 * s[0] + eps) / (s[1] + s[2] + eps)
    dice_roi = (2.0 * s[3] + eps) / (s[4] + s[5] + eps)
    return 1.0 - dice, 1.0 - dice_roi


def _reference(inp, target, roi_mask, epsilon=1.0):
    """Pure-JAX reference mirroring the PyTorch module."""
    x = jax.nn.sigmoid(inp.astype(jnp.float32)).reshape(-1)
    t = target.astype(jnp.float32).reshape(-1)
    m = roi_mask[:, 1:2].astype(jnp.float32).reshape(-1)
    inter = x * t
    dice = (2.0 * inter.sum() + epsilon) / (x.sum() + t.sum() + epsilon)
    dice_roi = (2.0 * (inter * m).sum() + epsilon) / (
        (x * m).sum() + (t * m).sum() + epsilon
    )
    return 1.0 - dice, 1.0 - dice_roi


if __name__ == "__main__":
    root = jax.random.PRNGKey(0)

    def make_case(k, n, h, w):
        k1, k2, k3 = jax.random.split(k, 3)
        logits = jax.random.normal(k1, (n, 1, h, w), dtype=jnp.float32)
        tgt = (jax.random.uniform(k2, (n, 1, h, w)) > 0.5).astype(jnp.float32)
        roi = (jax.random.uniform(k3, (n, 2, h, w)) > 0.5).astype(jnp.float32)
        return logits, tgt, roi

    # (N, H, W), max_tile_rows override. Covers: aligned fast path,
    # ragged fast path (forced small tile), misaligned fallback path,
    # ragged fallback path.
    cases = [
        ((2, 32, 32), _MAX_TILE_R),
        ((1, 48, 64), 16),
        ((2, 16, 16), _MAX_TILE_R),
        ((1, 50, 50), 16),
    ]
    keys = jax.random.split(root, len(cases))
    for k, ((n, h, w), mtr) in zip(keys, cases):
        logits, tgt, roi = make_case(k, n, h, w)
        loss, loss_roi = masked_dice_loss(logits, tgt, roi, epsilon=1.0,
                                          max_tile_rows=mtr)
        loss = jax.block_until_ready(loss)
        loss_roi = jax.block_until_ready(loss_roi)
        ref_loss, ref_loss_roi = _reference(logits, tgt, roi, epsilon=1.0)
        assert abs(float(loss) - float(ref_loss)) < 1e-5, \
            (n, h, w, float(loss), float(ref_loss))
        assert abs(float(loss_roi) - float(ref_loss_roi)) < 1e-5, \
            (n, h, w, float(loss_roi), float(ref_loss_roi))

    print("KERNEL_OK")
</pallas_src>

<mosaic_0001>
module attributes {stable_mosaic.version = 11 : i64} {
  func.func @kernel(%arg0: i32, %arg1: i32, %arg2: memref<1x8x128xf32, #tpu.memory_space<vmem>>, %arg3: memref<1x8x128xf32, #tpu.memory_space<vmem>>, %arg4: memref<1x1x8x128xf32, #tpu.memory_space<vmem>>, %arg5: memref<1x6x8x128xf32, #tpu.memory_space<vmem>>) attributes {dimension_semantics = [#tpu.dimension_semantics<parallel>, #tpu.dimension_semantics<arbitrary>], iteration_bounds = array<i64: 2, 1>, scalar_prefetch = 0 : i64, scratch_operands = 0 : i64, tpu.core_type = #tpu.core_type<tc>, window_params = [{transform_indices = @transform_0, window_bounds = array<i64: 1, 8, 128>}, {transform_indices = @transform_1, window_bounds = array<i64: 1, 8, 128>}, {transform_indices = @transform_2, window_bounds = array<i64: 1, 1, 8, 128>}, {transform_indices = @transform_3, window_bounds = array<i64: 1, 6, 8, 128>}]} {
    %c0_i32 = arith.constant 0 : i32
    %0 = arith.cmpi eq, %arg1, %c0_i32 : i32
    %1 = arith.extui %0 : i1 to i32
    %c0_i32_0 = arith.constant 0 : i32
    %2 = arith.cmpi ne, %1, %c0_i32_0 : i32
    scf.if %2 {
      %cst_59 = arith.constant 0.000000e+00 : f32
      %66 = vector.broadcast %cst_59 : f32 to vector<6x8x128xf32>
      %c0_60 = arith.constant 0 : index
      %c0_61 = arith.constant 0 : index
      %c0_62 = arith.constant 0 : index
      %c0_63 = arith.constant 0 : index
      %67 = vector.load %arg5[%c0_60, %c0_61, %c0_62, %c0_63] : memref<1x6x8x128xf32, #tpu.memory_space<vmem>>, vector<1x6x8x128xf32>
      %68 = vector.shape_cast %67 : vector<1x6x8x128xf32> to vector<6x8x128xf32>
      %69 = vector.shape_cast %66 : vector<6x8x128xf32> to vector<1x6x8x128xf32>
      tpu.vector_store %arg5[%c0_60, %c0_61, %c0_62, %c0_63], %69 {strides = array<i32>} : memref<1x6x8x128xf32, #tpu.memory_space<vmem>>, vector<1x6x8x128xf32>,
    } else {
    }
    %c0 = arith.constant 0 : index
    %c0_1 = arith.constant 0 : index
    %c0_2 = arith.constant 0 : index
    %3 = vector.load %arg2[%c0, %c0_1, %c0_2] : memref<1x8x128xf32, #tpu.memory_space<vmem>>, vector<1x8x128xf32>
    %4 = vector.shape_cast %3 : vector<1x8x128xf32> to vector<8x128xf32>
    %5 = arith.negf %4 : vector<8x128xf32>
    %6 = math.exp %5 : vector<8x128xf32>
    %cst = arith.constant 1.000000e+00 : f32
    %7 = vector.broadcast %cst : f32 to vector<8x128xf32>
    %8 = arith.addf %7, %6 : vector<8x128xf32>
    %9 = arith.divf %7, %8 : vector<8x128xf32>
    %c0_3 = arith.constant 0 : index
    %c0_4 = arith.constant 0 : index
    %c0_5 = arith.constant 0 : index
    %10 = vector.load %arg3[%c0_3, %c0_4, %c0_5] : memref<1x8x128xf32, #tpu.memory_space<vmem>>, vector<1x8x128xf32>
    %11 = vector.shape_cast %10 : vector<1x8x128xf32> to vector<8x128xf32>
    %c0_6 = arith.constant 0 : index
    %c0_7 = arith.constant 0 : index
    %c0_8 = arith.constant 0 : index
    %c0_9 = arith.constant 0 : index
    %12 = vector.load %arg4[%c0_6, %c0_7, %c0_8, %c0_9] : memref<1x1x8x128xf32, #tpu.memory_space<vmem>>, vector<1x1x8x128xf32>
    %13 = vector.shape_cast %12 : vector<1x1x8x128xf32> to vector<8x128xf32>
    %14 = arith.mulf %9, %11 : vector<8x128xf32>
    %c0_10 = arith.constant 0 : index
    %c0_11 = arith.constant 0 : index
    %c0_12 = arith.constant 0 : index
    %c0_13 = arith.constant 0 : index
    %15 = vector.load %arg5[%c0_10, %c0_11, %c0_12, %c0_13] : memref<1x6x8x128xf32, #tpu.memory_space<vmem>>, vector<1x1x8x128xf32>
    %16 = vector.shape_cast %15 : vector<1x1x8x128xf32> to vector<8x128xf32>
    %17 = vector.shape_cast %14 : vector<8x128xf32> to vector<1x8x128xf32>
    %cst_14 = arith.constant dense<0.000000e+00> : vector<8x128xf32>
    %18 = vector.multi_reduction <add>, %17, %cst_14 [0] : vector<1x8x128xf32> to vector<8x128xf32>
    %19 = arith.addf %16, %18 : vector<8x128xf32>
    %c0_15 = arith.constant 0 : index
    %c0_16 = arith.constant 0 : index
    %c0_17 = arith.constant 0 : index
    %c0_18 = arith.constant 0 : index
    %20 = vector.load %arg5[%c0_15, %c0_16, %c0_17, %c0_18] : memref<1x6x8x128xf32, #tpu.memory_space<vmem>>, vector<1x1x8x128xf32>
    %21 = vector.shape_cast %20 : vector<1x1x8x128xf32> to vector<8x128xf32>
    %22 = vector.shape_cast %19 : vector<8x128xf32> to vector<1x1x8x128xf32>
    tpu.vector_store %arg5[%c0_15, %c0_16, %c0_17, %c0_18], %22 {strides = array<i32>} : memref<1x6x8x128xf32, #tpu.memory_space<vmem>>, vector<1x1x8x128xf32>,
    %c0_19 = arith.constant 0 : index
    %c1 = arith.constant 1 : index
    %c0_20 = arith.constant 0 : index
    %c0_21 = arith.constant 0 : index
    %23 = vector.load %arg5[%c0_19, %c1, %c0_20, %c0_21] : memref<1x6x8x128xf32, #tpu.memory_space<vmem>>, vector<1x1x8x128xf32>
    %24 = vector.shape_cast %23 : vector<1x1x8x128xf32> to vector<8x128xf32>
    %25 = vector.shape_cast %9 : vector<8x128xf32> to vector<1x8x128xf32>
    %cst_22 = arith.constant dense<0.000000e+00> : vector<8x128xf32>
    %26 = vector.multi_reduction <add>, %25, %cst_22 [0] : vector<1x8x128xf32> to vector<8x128xf32>
    %27 = arith.addf %24, %26 : vector<8x128xf32>
    %c0_23 = arith.constant 0 : index
    %c1_24 = arith.constant 1 : index
    %c0_25 = arith.constant 0 : index
    %c0_26 = arith.constant 0 : index
    %28 = vector.load %arg5[%c0_23, %c1_24, %c0_25, %c0_26] : memref<1x6x8x128xf32, #tpu.memory_space<vmem>>, vector<1x1x8x128xf32>
    %29 = vector.shape_cast %28 : vector<1x1x8x128xf32> to vector<8x128xf32>
    %30 = vector.shape_cast %27 : vector<8x128xf32> to vector<1x1x8x128xf32>
    tpu.vector_store %arg5[%c0_23, %c1_24, %c0_25, %c0_26], %30 {strides = array<i32>} : memref<1x6x8x128xf32, #tpu.memory_space<vmem>>, vector<1x1x8x128xf32>,
    %c0_27 = arith.constant 0 : index
    %c2 = arith.constant 2 : index
    %c0_28 = arith.constant 0 : index
    %c0_29 = arith.constant 0 : index
    %31 = vector.load %arg5[%c0_27, %c2, %c0_28, %c0_29] : memref<1x6x8x128xf32, #tpu.memory_space<vmem>>, vector<1x1x8x128xf32>
    %32 = vector.shape_cast %31 : vector<1x1x8x128xf32> to vector<8x128xf32>
    %33 = vector.shape_cast %11 : vector<8x128xf32> to vector<1x8x128xf32>
    %cst_30 = arith.constant dense<0.000000e+00> : vector<8x128xf32>
    %34 = vector.multi_reduction <add>, %33, %cst_30 [0] : vector<1x8x128xf32> to vector<8x128xf32>
    %35 = arith.addf %32, %34 : vector<8x128xf32>
    %c0_31 = arith.constant 0 : index
    %c2_32 = arith.constant 2 : index
    %c0_33 = arith.constant 0 : index
    %c0_34 = arith.constant 0 : index
    %36 = vector.load %arg5[%c0_31, %c2_32, %c0_33, %c0_34] : memref<1x6x8x128xf32, #tpu.memory_space<vmem>>, vector<1x1x8x128xf32>
    %37 = vector.shape_cast %36 : vector<1x1x8x128xf32> to vector<8x128xf32>
    %38 = vector.shape_cast %35 : vector<8x128xf32> to vector<1x1x8x128xf32>
    tpu.vector_store %arg5[%c0_31, %c2_32, %c0_33, %c0_34], %38 {strides = array<i32>} : memref<1x6x8x128xf32, #tpu.memory_space<vmem>>, vector<1x1x8x128xf32>,
    %c0_35 = arith.constant 0 : index
    %c3 = arith.constant 3 : index
    %c0_36 = arith.constant 0 : index
    %c0_37 = arith.constant 0 : index
    %39 = vector.load %arg5[%c0_35, %c3, %c0_36, %c0_37] : memref<1x6x8x128xf32, #tpu.memory_space<vmem>>, vector<1x1x8x128xf32>
    %40 = vector.shape_cast %39 : vector<1x1x8x128xf32> to vector<8x128xf32>
    %41 = arith.mulf %14, %13 : vector<8x128xf32>
    %42 = vector.shape_cast %41 : vector<8x128xf32> to vector<1x8x128xf32>
    %cst_38 = arith.constant dense<0.000000e+00> : vector<8x128xf32>
    %43 = vector.multi_reduction <add>, %42, %cst_38 [0] : vector<1x8x128xf32> to vector<8x128xf32>
    %44 = arith.addf %40, %43 : vector<8x128xf32>
    %c0_39 = arith.constant 0 : index
    %c3_40 = arith.constant 3 : index
    %c0_41 = arith.constant 0 : index
    %c0_42 = arith.constant 0 : index
    %45 = vector.load %arg5[%c0_39, %c3_40, %c0_41, %c0_42] : memref<1x6x8x128xf32, #tpu.memory_space<vmem>>, vector<1x1x8x128xf32>
    %46 = vector.shape_cast %45 : vector<1x1x8x128xf32> to vector<8x128xf32>
    %47 = vector.shape_cast %44 : vector<8x128xf32> to vector<1x1x8x128xf32>
    tpu.vector_store %arg5[%c0_39, %c3_40, %c0_41, %c0_42], %47 {strides = array<i32>} : memref<1x6x8x128xf32, #tpu.memory_space<vmem>>, vector<1x1x8x128xf32>,
    %c0_43 = arith.constant 0 : index
    %c4 = arith.constant 4 : index
    %c0_44 = arith.constant 0 : index
    %c0_45 = arith.constant 0 : index
    %48 = vector.load %arg5[%c0_43, %c4, %c0_44, %c0_45] : memref<1x6x8x128xf32, #tpu.memory_space<vmem>>, vector<1x1x8x128xf32>
    %49 = vector.shape_cast %48 : vector<1x1x8x128xf32> to vector<8x128xf32>
    %50 = arith.mulf %9, %13 : vector<8x128xf32>
    %51 = vector.shape_cast %50 : vector<8x128xf32> to vector<1x8x128xf32>
    %cst_46 = arith.constant dense<0.000000e+00> : vector<8x128xf32>
    %52 = vector.multi_reduction <add>, %51, %cst_46 [0] : vector<1x8x128xf32> to vector<8x128xf32>
    %53 = arith.addf %49, %52 : vector<8x128xf32>
    %c0_47 = arith.constant 0 : index
    %c4_48 = arith.constant 4 : index
    %c0_49 = arith.constant 0 : index
    %c0_50 = arith.constant 0 : index
    %54 = vector.load %arg5[%c0_47, %c4_48, %c0_49, %c0_50] : memref<1x6x8x128xf32, #tpu.memory_space<vmem>>, vector<1x1x8x128xf32>
    %55 = vector.shape_cast %54 : vector<1x1x8x128xf32> to vector<8x128xf32>
    %56 = vector.shape_cast %53 : vector<8x128xf32> to vector<1x1x8x128xf32>
    tpu.vector_store %arg5[%c0_47, %c4_48, %c0_49, %c0_50], %56 {strides = array<i32>} : memref<1x6x8x128xf32, #tpu.memory_space<vmem>>, vector<1x1x8x128xf32>,
    %c0_51 = arith.constant 0 : index
    %c5 = arith.constant 5 : index
    %c0_52 = arith.constant 0 : index
    %c0_53 = arith.constant 0 : index
    %57 = vector.load %arg5[%c0_51, %c5, %c0_52, %c0_53] : memref<1x6x8x128xf32, #tpu.memory_space<vmem>>, vector<1x1x8x128xf32>
    %58 = vector.shape_cast %57 : vector<1x1x8x128xf32> to vector<8x128xf32>
    %59 = arith.mulf %11, %13 : vector<8x128xf32>
    %60 = vector.shape_cast %59 : vector<8x128xf32> to vector<1x8x128xf32>
    %cst_54 = arith.constant dense<0.000000e+00> : vector<8x128xf32>
    %61 = vector.multi_reduction <add>, %60, %cst_54 [0] : vector<1x8x128xf32> to vector<8x128xf32>
    %62 = arith.addf %58, %61 : vector<8x128xf32>
    %c0_55 = arith.constant 0 : index
    %c5_56 = arith.constant 5 : index
    %c0_57 = arith.constant 0 : index
    %c0_58 = arith.constant 0 : index
    %63 = vector.load %arg5[%c0_55, %c5_56, %c0_57, %c0_58] : memref<1x6x8x128xf32, #tpu.memory_space<vmem>>, vector<1x1x8x128xf32>
    %64 = vector.shape_cast %63 : vector<1x1x8x128xf32> to vector<8x128xf32>
    %65 = vector.shape_cast %62 : vector<8x128xf32> to vector<1x1x8x128xf32>
    tpu.vector_store %arg5[%c0_55, %c5_56, %c0_57, %c0_58], %65 {strides = array<i32>} : memref<1x6x8x128xf32, #tpu.memory_space<vmem>>, vector<1x1x8x128xf32>,
    return
  }
  func.func @transform_0(%arg0: i32, %arg1: i32) -> (i32, i32, i32) {
    %c0_i32 = arith.constant 0 : i32
    %c0_i32_0 = arith.constant 0 : i32
    return %arg0, %arg1, %c0_i32 : i32, i32, i32
  }
  func.func @transform_1(%arg0: i32, %arg1: i32) -> (i32, i32, i32) {
    %c0_i32 = arith.constant 0 : i32
    %c0_i32_0 = arith.constant 0 : i32
    return %arg0, %arg1, %c0_i32 : i32, i32, i32
  }
  func.func @transform_2(%arg0: i32, %arg1: i32) -> (i32, i32, i32, i32) {
    %c1_i32 = arith.constant 1 : i32
    %c0_i32 = arith.constant 0 : i32
    %c0_i32_0 = arith.constant 0 : i32
    return %arg0, %c1_i32, %arg1, %c0_i32 : i32, i32, i32, i32
  }
  func.func @transform_3(%arg0: i32, %arg1: i32) -> (i32, i32, i32, i32) {
    %c0_i32 = arith.constant 0 : i32
    %c0_i32_0 = arith.constant 0 : i32
    %c0_i32_1 = arith.constant 0 : i32
    %c0_i32_2 = arith.constant 0 : i32
    return %arg0, %c0_i32, %c0_i32_0, %c0_i32_1 : i32, i32, i32, i32
  }
}

</mosaic_0001>

<llo_original>
// kernel: tpu_custom_call.1
$region0: #{tpu_custom_call.1}
  #allocation0 [shape = 'u32[]', space=smem, size = 0x4, offset = 0x4, fixed_abs, tag = 'smem constant byte address 0x4 - core index']
  #allocation1 [shape = 'u32[72,128]{1,0:T(1,128)}', space=vmem, size = 0x9000, scoped, tag = 'internal scratch']
  %s0 = inlined_call_operand.hbm [shape: f32[2,8,128], index: 0, kind: input, shape index: {}]
  %s1 = inlined_call_operand.hbm [shape: f32[2,8,128], index: 1, kind: input, shape index: {}]
  %s2 = inlined_call_operand.hbm [shape: f32[2,2,8,128], index: 2, kind: input, shape index: {}]
  %s3 = inlined_call_operand.hbm [shape: f32[2,6,8,128], index: 3, kind: output, shape index: {}]
  %s4 = sld [smem:[#allocation0]]
  $region61: #{tpu_custom_call.1} parent=0
    _
  %s6 = ssub.s32 1, %s4
  %s7 = scalar_select 0, %s6, %s4
  $region1: #{tpu_custom_call.1} parent=0
    #allocation2 [shape = 'u8[8192]{0}', space=vmem, size = 0x2000, scoped, tag = 'input window, operand 0']
    #allocation3 [shape = 's32[2]{0}', space=sflag, size = 0x8, scoped, tag = 'scoped memory for tpu_custom_call.1']
    #allocation4 [shape = 's32[2]{0}', space=sflag, size = 0x8, scoped, tag = 'scoped memory for tpu_custom_call.1']
    #allocation5 [shape = 'u8[8192]{0}', space=vmem, size = 0x2000, scoped, tag = 'input window, operand 1']
    #allocation6 [shape = 's32[2]{0}', space=sflag, size = 0x8, scoped, tag = 'scoped memory for tpu_custom_call.1']
    #allocation7 [shape = 'u8[8192]{0}', space=vmem, size = 0x2000, scoped, tag = 'input window, operand 2']
    #allocation8 [shape = 'u8[49152]{0}', space=vmem, size = 0xc000, scoped, tag = 'output window, operand 0']
    %8 = vsyncpa [#allocation3], 0
    %s9 = scalar_lea.sflag [#allocation3], 1
    %10 = vsyncpa %s9, 0
    %11 = vsyncpa [#allocation6], 0
    %s12 = scalar_lea.sflag [#allocation6], 1
    %13 = vsyncpa %s12, 0
    %14 = vsyncpa [#allocation4], 0
    %s15 = scalar_lea.sflag [#allocation4], 1
    %16 = vsyncpa %s15, 0
    loop: start=0, step=1, limit=4
    $region2: #{tpu_custom_call.1} parent=1 // loop_pre_header
      _
    $region3: #{tpu_custom_call.1} parent=1 // loop_header
      %s18 = sphi 0, %s22
      %p19 = scmp.ge.s32.totalorder %s18, 4
      %s25 = sphi 0, %s37
      %s26 = sphi 0, %s33
      %s27 = sphi 0, %s25
      %s28 = sphi 0, %s26
      %s29 = sphi 0, %s27
      %s30 = sphi 0, %s28
      %s42 = sphi 0, %s44
      %s45 = sphi 0, %s42
      %s46 = sphi 0, %s45
      %s62 = sphi 0, %s46
      %s70 = sphi 0, %s72
      %s73 = sphi 0, %s70
      %s74 = sphi 0, %s73
      %s90 = sphi 0, %s74
      %s98 = sphi 0, %s100
      %s101 = sphi 0, %s98
      %s102 = sphi 0, %s101
      %s118 = sphi 0, %s102
      %s124 = sphi 0, %s126
      %s127 = sphi 0, %s124
      %s128 = sphi 0, %s127
      %s144 = sphi 0, %s128
    $region4: #{tpu_custom_call.1} parent=1 // loop_header_branch
      %21 = sbr.rel (%p19) target = $region8
    $region5: #{tpu_custom_call.1} parent=1 // loop_body
      %s23 = ssub.s32 %s18, 1
      %s24 = ssub.s32 %s18, 2
      %s31 = sadd.s32 1, %s26
      %p32 = scmp.ge.s32.totalorder %s31, 1
      %s33 = scalar_select %p32, 0, %s31
      %s34 = sadd.s32 1, %s25
      %s35 = scalar_select %p32, %s34, %s25
      %p36 = scmp.ge.s32.totalorder %s35, 2
      %s37 = scalar_select %p36, 0, %s35
      %s38 = ssub.s32 %s25, %s37
      %s39 = ssub.s32 %s26, %s33
      %s40 = sor.u32 %s38, %s39
      %p41 = scmp.eq.s32.totalorder %s40, 0
      %s43 = sadd.s32 %s42, 1
      %s44 = scalar_select %p41, %s42, %s43
      %p47 = pneg %p41
      %p48 = scmp.eq.s32.totalorder %s18, 1
      %p49 = por %p47, %p48
      %p50 = scmp.ne.s32.totalorder %s42, %s45
      %p51 = scmp.eq.s32.totalorder %s18, 0
      %p52 = por %p50, %p51
      %p53 = scmp.ne.s32.totalorder %s42, %s45
      %p54 = scmp.eq.s32.totalorder %s23, 1
      %p55 = por %p53, %p54
      %p56 = scmp.ne.s32.totalorder %s45, %s46
      %p57 = scmp.eq.s32.totalorder %s23, 0
      %p58 = por %p56, %p57
      %p59 = scmp.ne.s32.totalorder %s45, %s46
      %p60 = scmp.eq.s32.totalorder %s24, 1
      %p61 = por %p59, %p60
      %p63 = scmp.ne.s32.totalorder %s46, %s62
      %p64 = scmp.eq.s32.totalorder %s24, 0
      %p65 = por %p63, %p64
      %s66 = ssub.s32 %s25, %s37
      %s67 = ssub.s32 %s26, %s33
      %s68 = sor.u32 %s66, %s67
      %p69 = scmp.eq.s32.totalorder %s68, 0
      %s71 = sadd.s32 %s70, 1
      %s72 = scalar_select %p69, %s70, %s71
      %p75 = pneg %p69
      %p76 = scmp.eq.s32.totalorder %s18, 1
      %p77 = por %p75, %p76
      %p78 = scmp.ne.s32.totalorder %s70, %s73
      %p79 = scmp.eq.s32.totalorder %s18, 0
      %p80 = por %p78, %p79
      %p81 = scmp.ne.s32.totalorder %s70, %s73
      %p82 = scmp.eq.s32.totalorder %s23, 1
      %p83 = por %p81, %p82
      %p84 = scmp.ne.s32.totalorder %s73, %s74
      %p85 = scmp.eq.s32.totalorder %s23, 0
      %p86 = por %p84, %p85
      %p87 = scmp.ne.s32.totalorder %s73, %s74
      %p88 = scmp.eq.s32.totalorder %s24, 1
      %p89 = por %p87, %p88
      %p91 = scmp.ne.s32.totalorder %s74, %s90
      %p92 = scmp.eq.s32.totalorder %s24, 0
      %p93 = por %p91, %p92
      %s94 = ssub.s32 %s25, %s37
      %s95 = ssub.s32 %s26, %s33
      %s96 = sor.u32 %s94, %s95
      %p97 = scmp.eq.s32.totalorder %s96, 0
      %s99 = sadd.s32 %s98, 1
      %s100 = scalar_select %p97, %s98, %s99
      %p103 = pneg %p97
      %p104 = scmp.eq.s32.totalorder %s18, 1
      %p105 = por %p103, %p104
      %p106 = scmp.ne.s32.totalorder %s98, %s101
      %p107 = scmp.eq.s32.totalorder %s18, 0
      %p108 = por %p106, %p107
      %p109 = scmp.ne.s32.totalorder %s98, %s101
      %p110 = scmp.eq.s32.totalorder %s23, 1
      %p111 = por %p109, %p110
      %p112 = scmp.ne.s32.totalorder %s101, %s102
      %p113 = scmp.eq.s32.totalorder %s23, 0
      %p114 = por %p112, %p113
      %p115 = scmp.ne.s32.totalorder %s101, %s102
      %p116 = scmp.eq.s32.totalorder %s24, 1
      %p117 = por %p115, %p116
      %p119 = scmp.ne.s32.totalorder %s102, %s118
      %p120 = scmp.eq.s32.totalorder %s24, 0
      %p121 = por %p119, %p120
      %s122 = ssub.s32 %s25, %s37
      %p123 = scmp.eq.s32.totalorder %s122, 0
      %s125 = sadd.s32 %s124, 1
      %s126 = scalar_select %p123, %s124, %s125
      %p129 = pneg %p123
      %p130 = scmp.eq.s32.totalorder %s18, 1
      %p131 = por %p129, %p130
      %p132 = scmp.ne.s32.totalorder %s124, %s127
      %p133 = scmp.eq.s32.totalorder %s18, 0
      %p134 = por %p132, %p133
      %p135 = scmp.ne.s32.totalorder %s124, %s127
      %p136 = scmp.eq.s32.totalorder %s23, 1
      %p137 = por %p135, %p136
      %p138 = scmp.ne.s32.totalorder %s127, %s128
      %p139 = scmp.eq.s32.totalorder %s23, 0
      %p140 = por %p138, %p139
      %p141 = scmp.ne.s32.totalorder %s127, %s128
      %p142 = scmp.eq.s32.totalorder %s24, 1
      %p143 = por %p141, %p142
      %p145 = scmp.ne.s32.totalorder %s128, %s144
      %p146 = scmp.eq.s32.totalorder %s24, 0
      %p147 = por %p145, %p146
      %p148 = scmp.le.s32.totalorder 1, %s18
      %p149 = scmp.lt.s32.totalorder %s18, 3
      %p150 = pnand %p148, %p149
      %p151 = pneg %p150
      // Predicated region
      $region9: #{tpu_custom_call.1} parent=5 // pred_check
        _
      $region10: #{tpu_custom_call.1} parent=5 // pred_check_branch
        %153 = sbr.rel (%p150) target = $region12
      $region11: #{tpu_custom_call.1} parent=5 // pred_region
        %s154 = ssub.s32 %s18, 1
      $region12: #{tpu_custom_call.1} parent=5 // pred_fallthru
        _
      %p155 = scmp.lt.s32.totalorder %s18, 2
      // Predicated region
      $region13: #{tpu_custom_call.1} parent=5 // pred_check
        %p156 = pneg %p155
      $region14: #{tpu_custom_call.1} parent=5 // pred_check_branch
        %158 = sbr.rel (%p156) target = $region16
      $region15: #{tpu_custom_call.1} parent=5 // pred_region
        // Predicated region
        $region17: #{tpu_custom_call.1} parent=15 // pred_check
          %p159 = pneg %p52
        $region18: #{tpu_custom_call.1} parent=15 // pred_check_branch
          %161 = sbr.rel (%p159) target = $region20
        $region19: #{tpu_custom_call.1} parent=15 // pred_region
          %s162 = sand.u32 %s42, 1
          %s163 = scalar_lea.sflag [#allocation3], %s162
          %s164 = sand.u32 %s42, 1
          %s165 = smul.addr %s164, 8
          %s166 = scalar_lea.vmem [#allocation2], %s165
          %168 = vsyncadd %s163, 0
          %s169 = sadd.s32 %s26, %s25
          %s170 = smul.addr %s169, 8
          %s171 = scalar_lea.hbm %s0, %s170
          %s173 = sshll.u32 %s171, 4
          %s174 = int_to_ptr.hbm [resolvable:$true] %s173
          %s175 = sshll.u32 %s166, 4
          %s176 = int_to_ptr.vmem [resolvable:$true] %s175
          %178 = dma.hbm_to_vmem [thread:$0]  %s174, 128, %s176, %s163
        $region20: #{tpu_custom_call.1} parent=15 // pred_fallthru
          _
        // Predicated region
        $region21: #{tpu_custom_call.1} parent=15 // pred_check
          %p179 = pneg %p80
        $region22: #{tpu_custom_call.1} parent=15 // pred_check_branch
          %181 = sbr.rel (%p179) target = $region24
        $region23: #{tpu_custom_call.1} parent=15 // pred_region
          %s182 = sand.u32 %s18, 1
          %s183 = scalar_lea.sflag [#allocation6], %s182
          %s184 = sand.u32 %s70, 1
          %s185 = smul.addr %s184, 8
          %s186 = scalar_lea.vmem [#allocation5], %s185
          %188 = vsyncadd %s183, 0
          %s189 = sadd.s32 %s26, %s25
          %s190 = smul.addr %s189, 8
          %s191 = scalar_lea.hbm %s1, %s190
          %s193 = sshll.u32 %s191, 4
          %s194 = int_to_ptr.hbm [resolvable:$true] %s193
          %s195 = sshll.u32 %s186, 4
          %s196 = int_to_ptr.vmem [resolvable:$true] %s195
          %198 = dma.hbm_to_vmem [thread:$0]  %s194, 128, %s196, %s183
        $region24: #{tpu_custom_call.1} parent=15 // pred_fallthru
          _
        // Predicated region
        $region25: #{tpu_custom_call.1} parent=15 // pred_check
          %p199 = pneg %p108
        $region26: #{tpu_custom_call.1} parent=15 // pred_check_branch
          %201 = sbr.rel (%p199) target = $region28
        $region27: #{tpu_custom_call.1} parent=15 // pred_region
          %s202 = sand.u32 %s18, 1
          %s203 = scalar_lea.sflag [#allocation6], %s202
          %s204 = sand.u32 %s98, 1
          %s205 = smul.addr %s204, 8
          %s206 = scalar_lea.vmem [#allocation7], %s205
          %208 = vsyncadd %s203, 0
          %s209 = sadd.s32 %s26, 1
          %s210 = smul.addr %s25, 2
          %s211 = sadd.s32 %s209, %s210
          %s212 = smul.addr %s211, 8
          %s213 = scalar_lea.hbm %s2, %s212
          %s215 = sshll.u32 %s213, 4
          %s216 = int_to_ptr.hbm [resolvable:$true] %s215
          %s217 = sshll.u32 %s206, 4
          %s218 = int_to_ptr.vmem [resolvable:$true] %s217
          %220 = dma.hbm_to_vmem [thread:$0]  %s216, 128, %s218, %s203
        $region28: #{tpu_custom_call.1} parent=15 // pred_fallthru
          _
      $region16: #{tpu_custom_call.1} parent=5 // pred_fallthru
        _
      %p221 = scmp.le.s32.totalorder 1, %s18
      %p222 = scmp.lt.s32.totalorder %s18, 3
      %p223 = pnand %p221, %p222
      %p224 = pneg %p223
      // Predicated region
      $region29: #{tpu_custom_call.1} parent=5 // pred_check
        _
      $region30: #{tpu_custom_call.1} parent=5 // pred_check_branch
        %226 = sbr.rel (%p223) target = $region32
      $region31: #{tpu_custom_call.1} parent=5 // pred_region
        %s227 = ssub.s32 %s18, 1
        %s228 = sand.u32 %s45, 1
        %s229 = scalar_lea.sflag [#allocation3], %s228
        %s230 = sand.u32 %s45, 1
        %s231 = smul.addr %s230, 8
        %s232 = scalar_lea.vmem [#allocation2], %s231
        // Predicated region
        $region33: #{tpu_custom_call.1} parent=31 // pred_check
          %p233 = pneg %p58
        $region34: #{tpu_custom_call.1} parent=31 // pred_check_branch
          %235 = sbr.rel (%p233) target = $region36
        $region35: #{tpu_custom_call.1} parent=31 // pred_region
          %237 = dma.done %s229, 128
        $region36: #{tpu_custom_call.1} parent=31 // pred_fallthru
          _
        %s238 = sand.u32 %s23, 1
        %s239 = scalar_lea.sflag [#allocation6], %s238
        %s240 = sand.u32 %s73, 1
        %s241 = smul.addr %s240, 8
        %s242 = scalar_lea.vmem [#allocation5], %s241
        // Predicated region
        $region37: #{tpu_custom_call.1} parent=31 // pred_check
          %p243 = pneg %p86
        $region38: #{tpu_custom_call.1} parent=31 // pred_check_branch
          %245 = sbr.rel (%p243) target = $region40
        $region39: #{tpu_custom_call.1} parent=31 // pred_region
          %247 = dma.done %s239, 128
        $region40: #{tpu_custom_call.1} parent=31 // pred_fallthru
          _
        %s248 = sand.u32 %s23, 1
        %s249 = scalar_lea.sflag [#allocation6], %s248
        %s250 = sand.u32 %s101, 1
        %s251 = smul.addr %s250, 8
        %s252 = scalar_lea.vmem [#allocation7], %s251
        // Predicated region
        $region41: #{tpu_custom_call.1} parent=31 // pred_check
          %p253 = pneg %p114
        $region42: #{tpu_custom_call.1} parent=31 // pred_check_branch
          %255 = sbr.rel (%p253) target = $region44
        $region43: #{tpu_custom_call.1} parent=31 // pred_region
          %257 = dma.done %s249, 128
        $region44: #{tpu_custom_call.1} parent=31 // pred_fallthru
          _
        %s258 = sand.u32 %s45, 1
        %s259 = scalar_lea.sflag [#allocation3], %s258
        %s260 = sand.u32 %s45, 1
        %s261 = smul.addr %s260, 8
        %s262 = scalar_lea.vmem [#allocation2], %s261
        %p263 = pneg %p58
        %p264 = pneg %p55
        %s265 = sand.u32 %s23, 1
        %s266 = scalar_lea.sflag [#allocation6], %s265
        %s267 = sand.u32 %s73, 1
        %s268 = smul.addr %s267, 8
        %s269 = scalar_lea.vmem [#allocation5], %s268
        %p270 = pneg %p86
        %p271 = pneg %p83
        %s272 = sand.u32 %s23, 1
        %s273 = scalar_lea.sflag [#allocation6], %s272
        %s274 = sand.u32 %s101, 1
        %s275 = smul.addr %s274, 8
        %s276 = scalar_lea.vmem [#allocation7], %s275
        %p277 = pneg %p114
        %p278 = pneg %p111
        %p279 = pneg %p140
        %p280 = pneg %p137
        %s281 = sand.u32 %s127, 1
        %s282 = scalar_lea.sflag [#allocation4], %s281
        %s283 = sand.u32 %s127, 1
        %s284 = smul.addr %s283, 48
        %s285 = scalar_lea.vmem [#allocation8], %s284
        %p286 = scmp.eq.s32.totalorder %s28, 0
        // Predicated region
        $region45: #{tpu_custom_call.1} parent=31 // pred_check
          %p287 = pneg %p286
        $region46: #{tpu_custom_call.1} parent=31 // pred_check_branch
          %289 = sbr.rel (%p287) target = $region48
        $region47: #{tpu_custom_call.1} parent=31 // pred_region
          %290 = vst [vmem:[%s285] sm:$0xff] 0.0
          %291 = vst [vmem:[%s285 + $0x8] sm:$0xff] 0.0
          %292 = vst [vmem:[%s285 + $0x10] sm:$0xff] 0.0
          %293 = vst [vmem:[%s285 + $0x18] sm:$0xff] 0.0
          %294 = vst [vmem:[%s285 + $0x20] sm:$0xff] 0.0
          %295 = vst [vmem:[%s285 + $0x28] sm:$0xff] 0.0
        $region48: #{tpu_custom_call.1} parent=31 // pred_fallthru
          _
        %v296 = vld [vmem:[%s232] sm:$0xff]
        %v297 = vxor.u32 %v296, 2147483648
        %v298 = vmul.f32 %v297, 1.442695
        %v299 = vpow.pop %v298
        %v300 = vadd.f32 %v299, 1.0
        %v301 = vrcp.pop %v300
        %v302 = vmul.f32 %v300, %v301
        %v303 = vsub.f32 1.0, %v302
        %v304 = vmul.f32 %v301, %v303
        %v305 = vadd.f32 %v301, %v304
        %vm306 = vweird.f32 %v300
        %vm307 = vweird.f32 %v301
        %vm308 = vmor %vm306, %vm307
        %v309 = vsel %vm308, %v301, %v305
        %v310 = vand.u32 2147483647, %v300
        %vm311 = vcmp.eq.f32.partialorder %v310, 8.507059e+37
        %v312 = vand.u32 %v300, 2147483648
        %v313 = vor.u32 1.1754944e-38, %v312
        %v314 = vsel %vm311, %v313, %v309
        %v315 = vmul.f32 1.0, %v314
        %v316 = vld [vmem:[%s242] sm:$0xff]
        %v317 = vld [vmem:[%s252] sm:$0xff]
        %v318 = vmul.f32 %v315, %v316
        %v319 = vld [vmem:[%s285] sm:$0xff]
        %v320 = vadd.f32 %v318, 0.0
        %v321 = vadd.f32 %v319, %v320
        %322 = vst [vmem:[%s285] sm:$0xff] %v321
        %s323 = scalar_lea.vmem %s285, 8 [#allocation8]
        %v324 = vld [vmem:[%s323] sm:$0xff]
        %v325 = vadd.f32 %v315, 0.0
        %v326 = vadd.f32 %v324, %v325
        %327 = vst [vmem:[%s323] sm:$0xff] %v326
        %s328 = scalar_lea.vmem %s285, 16 [#allocation8]
        %v329 = vld [vmem:[%s328] sm:$0xff]
        %v330 = vadd.f32 %v316, 0.0
        %v331 = vadd.f32 %v329, %v330
        %332 = vst [vmem:[%s328] sm:$0xff] %v331
        %s333 = scalar_lea.vmem %s285, 24 [#allocation8]
        %v334 = vld [vmem:[%s333] sm:$0xff]
        %v335 = vmul.f32 %v318, %v317
        %v336 = vadd.f32 %v335, 0.0
        %v337 = vadd.f32 %v334, %v336
        %338 = vst [vmem:[%s333] sm:$0xff] %v337
        %s339 = scalar_lea.vmem %s285, 32 [#allocation8]
        %v340 = vld [vmem:[%s339] sm:$0xff]
        %v341 = vmul.f32 %v315, %v317
        %v342 = vadd.f32 %v341, 0.0
        %v343 = vadd.f32 %v340, %v342
        %344 = vst [vmem:[%s339] sm:$0xff] %v343
        %s345 = scalar_lea.vmem %s285, 40 [#allocation8]
        %v346 = vld [vmem:[%s345] sm:$0xff]
        %v347 = vmul.f32 %v316, %v317
        %v348 = vadd.f32 %v347, 0.0
        %v349 = vadd.f32 %v346, %v348
        %350 = vst [vmem:[%s345] sm:$0xff] %v349
        %s351 = sand.u32 %s127, 1
        %s352 = scalar_lea.sflag [#allocation4], %s351
        %s353 = sand.u32 %s127, 1
        %s354 = smul.addr %s353, 48
        %s355 = scalar_lea.vmem [#allocation8], %s354
        // Predicated region
        $region49: #{tpu_custom_call.1} parent=31 // pred_check
          %p356 = pneg %p137
        $region50: #{tpu_custom_call.1} parent=31 // pred_check_branch
          %358 = sbr.rel (%p356) target = $region52
        $region51: #{tpu_custom_call.1} parent=31 // pred_region
          %360 = vsyncadd %s352, 0
          %s361 = smul.addr %s27, 6
          %s362 = smul.addr %s361, 8
          %s363 = scalar_lea.hbm %s3, %s362
          %s364 = sshll.u32 %s355, 4
          %s365 = int_to_ptr.vmem [resolvable:$true] %s364
          %s366 = sshll.u32 %s363, 4
          %s367 = int_to_ptr.hbm [resolvable:$true] %s366
          %372 = dma.vmem_to_hbm [thread:$0]  %s365, 768, %s367, %s352, 128, 128, 8
        $region52: #{tpu_custom_call.1} parent=31 // pred_fallthru
          _
      $region32: #{tpu_custom_call.1} parent=5 // pred_fallthru
        _
      %p373 = scmp.le.s32.totalorder 2, %s18
      // Predicated region
      $region53: #{tpu_custom_call.1} parent=5 // pred_check
        %p374 = pneg %p373
      $region54: #{tpu_custom_call.1} parent=5 // pred_check_branch
        %376 = sbr.rel (%p374) target = $region56
      $region55: #{tpu_custom_call.1} parent=5 // pred_region
        %s377 = ssub.s32 %s18, 2
        // Predicated region
        $region57: #{tpu_custom_call.1} parent=55 // pred_check
          %p378 = pneg %p143
        $region58: #{tpu_custom_call.1} parent=55 // pred_check_branch
          %380 = sbr.rel (%p378) target = $region60
        $region59: #{tpu_custom_call.1} parent=55 // pred_region
          %s381 = sand.u32 %s128, 1
          %s382 = scalar_lea.sflag [#allocation4], %s381
          %s383 = sand.u32 %s128, 1
          %s384 = smul.addr %s383, 48
          %s385 = scalar_lea.vmem [#allocation8], %s384
          %387 = dma.done %s382, 768
        $region60: #{tpu_custom_call.1} parent=55 // pred_fallthru
          _
      $region56: #{tpu_custom_call.1} parent=5 // pred_fallthru
        _
    $region6: #{tpu_custom_call.1} parent=1 // loop_footer
      %s22 = sadd.s32 1, %s18
    $region7: #{tpu_custom_call.1} parent=1 // loop_footer_branch
      %17 = sbr.rel target = $region3
    $region8: #{tpu_custom_call.1} parent=1 // loop_exit
      _
    %388 = vsyncpa [#allocation3], 1
    %s389 = scalar_lea.sflag [#allocation3], 1
    %390 = vsyncpa %s389, 1
    %391 = vsyncpa [#allocation6], 1
    %s392 = scalar_lea.sflag [#allocation6], 1
    %393 = vsyncpa %s392, 1
    %394 = vsyncpa [#allocation4], 1
    %s395 = scalar_lea.sflag [#allocation4], 1
    %396 = vsyncpa %s395, 1

</llo_original>
